<compile_context>
chip_gen: v5e
topology: v5e:2x2
jax: 0.10.0
libtpu: 0.0.40
codegen_flags: <defaults>
</compile_context>

<pallas_src>
import functools

import jax
import jax.numpy as jnp
from jax.experimental import pallas as pl
from jax.experimental.pallas import tpu as pltpu

_LANE = 128
_MIB = 1024 * 1024


def _round_up(v, m):
    return -(-v // m) * m


# ---------------------------------------------------------------------------
# Hardware-aware sizing
# ---------------------------------------------------------------------------
def _vmem_capacity_bytes():
    try:
        info = pltpu.get_tpu_info()
        cap = getattr(info, "vmem_capacity_bytes", None)
        if cap:
            return int(cap)
    except Exception:
        pass
    return 128 * _MIB


def _block_budget_bytes(vmem_cap):
    """f32 bytes allowed for one (sublane/lane padded) x block resident in VMEM."""
    if vmem_cap <= 64 * _MIB:          # v7x-class: 64 MiB per TensorCore
        return 5 * _MIB
    return 14 * _MIB                   # v5e / v6e: 128 MiB


def _vmem_limit_bytes(padded_block_elems, itemsize, vmem_cap):
    # 2x double-buffered input + 2x output (native dtype) + ~2 f32 temporaries + slack.
    est = padded_block_elems * (4 * itemsize + 8) + 2 * _MIB
    cap = min(int(vmem_cap * 0.75), 100 * _MIB)   # ~48 MiB on v7x, ~96 MiB on v5e/v6e
    return int(min(cap, max(32 * _MIB, est)))


def _padded_slab_bytes(s, c2):
    # VMEM footprint of one (s, c2) f32 slice after (sublane, lane) tile padding.
    return _round_up(s, 16) * _round_up(c2, _LANE) * 4


def _choose_resident_tiles(B, S, C2, budget):
    """Pick (bt, c2_tile) for the single-pass kernel, or None -> S-tiled fallback."""
    if C2 <= _LANE:
        cands = [C2]                   # small channel count: take the full last dim
    else:
        cands = {c for c in (2048, 1024, 512, 256, 128) if c <= C2}
        if C2 % _LANE == 0:
            cands.add(C2)
        cands = sorted(cands, reverse=True)

    def fits(c):
        return _padded_slab_bytes(S, c) <= budget

    c2_tile = next((c for c in cands if C2 % c == 0 and fits(c)), None)
    if c2_tile is None:
        c2_tile = next((c for c in cands if fits(c)), None)
    if c2_tile is None:
        return None                    # even a 128-lane tile blows the budget

    # Fold batch instances into the block so each grid step moves MiB-scale DMAs.
    slab = _padded_slab_bytes(S, c2_tile)
    bt = max(1, min(B, budget // slab))

    # Keep >=2 grid steps across the parallel axes (2 TensorCores on v7x).
    n_c2 = pl.cdiv(C2, c2_tile)
    if pl.cdiv(B, bt) * n_c2 < 2:
        if B > 1:
            bt = pl.cdiv(B, 2)
        elif c2_tile >= 2 * _LANE:
            c2_tile = _round_up(c2_tile // 2, _LANE)
    return bt, c2_tile


# ---------------------------------------------------------------------------
# Kernels
# ---------------------------------------------------------------------------
def _resident_kernel(x_ref, o_ref, *, eps, inv_n):
    """One (bt, S, c2_tile) block; stats per (batch, channel) over the full S axis."""
    x = x_ref[...].astype(jnp.float32)
    mean = jnp.sum(x, axis=1, keepdims=True) * inv_n
    d = x - mean
    # Two-pass variance: x is VMEM-resident, so this extra sweep costs no HBM traffic
    # and avoids the E[x^2] - mean^2 cancellation.
    var = jnp.sum(d * d, axis=1, keepdims=True) * inv_n
    o_ref[...] = (d * jax.lax.rsqrt(var + eps)).astype(o_ref.dtype)


def _stats_kernel(x_ref, mean_ref, rstd_ref, *, eps, inv_n, s_total, s_tile):
    """Fallback pass 1: stream S tiles, accumulate per-(b, c2) sums in the outputs."""
    s_idx = pl.program_id(2)

    @pl.when(s_idx == 0)
    def _init():
        mean_ref[...] = jnp.zeros_like(mean_ref)
        rstd_ref[...] = jnp.zeros_like(rstd_ref)

    x = x_ref[...].astype(jnp.float32)                 # (1, s_tile, c2_tile)
    if s_total % s_tile != 0:
        # Mask the padded rows of the ragged last S tile out of the sums.
        row = jax.lax.broadcasted_iota(jnp.int32, x.shape, 1)
        x = jnp.where(s_idx * s_tile + row < s_total, x, 0.0)
    mean_ref[...] += jnp.sum(x, axis=1, keepdims=True)        # running sum(x)
    rstd_ref[...] += jnp.sum(x * x, axis=1, keepdims=True)    # running sum(x^2)

    @pl.when(s_idx == pl.num_programs(2) - 1)
    def _finalize():
        m = mean_ref[...] * inv_n
        # Streaming one-pass variance (x is not resident here); clamp guards cancellation.
        v = jnp.maximum(rstd_ref[...] * inv_n - m * m, 0.0)
        mean_ref[...] = m
        rstd_ref[...] = jax.lax.rsqrt(v + eps)


def _apply_kernel(x_ref, mean_ref, rstd_ref, o_ref):
    """Fallback pass 2: re-read x and normalize with the precomputed stats."""
    x = x_ref[...].astype(jnp.float32)
    o_ref[...] = ((x - mean_ref[...]) * rstd_ref[...]).astype(o_ref.dtype)


# ---------------------------------------------------------------------------
# pallas_call wrappers
# ---------------------------------------------------------------------------
def _resident_call(x3, bt, c2_tile, eps, vmem_cap):
    B, S, C2 = x3.shape
    grid = (pl.cdiv(B, bt), pl.cdiv(C2, c2_tile))
    padded_elems = bt * _padded_slab_bytes(S, c2_tile) // 4
    return pl.pallas_call(
        functools.partial(_resident_kernel, eps=eps, inv_n=1.0 / S),
        out_shape=jax.ShapeDtypeStruct((B, S, C2), x3.dtype),
        grid_spec=pltpu.PrefetchScalarGridSpec(
            num_scalar_prefetch=0,
            grid=grid,
            in_specs=[pl.BlockSpec((bt, S, c2_tile), lambda b, c: (b, 0, c))],
            out_specs=pl.BlockSpec((bt, S, c2_tile), lambda b, c: (b, 0, c)),
        ),
        compiler_params=pltpu.CompilerParams(
            dimension_semantics=("parallel", "parallel"),
            vmem_limit_bytes=_vmem_limit_bytes(padded_elems, x3.dtype.itemsize, vmem_cap),
        ),
    )(x3)


def _two_pass_call(x3, eps, budget, vmem_cap):
    B, S, C2 = x3.shape
    itemsize = x3.dtype.itemsize
    c2_tile = C2 if C2 <= _LANE else _LANE
    c2_pad = _round_up(c2_tile, _LANE)
    s_tile = max(16, (budget // (c2_pad * 4)) // 16 * 16)
    s_tile = min(s_tile, _round_up(S, 16))
    grid = (B, pl.cdiv(C2, c2_tile), pl.cdiv(S, s_tile))
    padded_elems = _padded_slab_bytes(s_tile, c2_tile) // 4
    vlim = _vmem_limit_bytes(padded_elems, itemsize, vmem_cap)

    x_spec = pl.BlockSpec((1, s_tile, c2_tile), lambda b, c, s: (b, s, c))
    stat_spec = pl.BlockSpec((1, 1, c2_tile), lambda b, c, s: (b, 0, c))
    stats_shape = jax.ShapeDtypeStruct((B, 1, C2), jnp.float32)

    mean, rstd = pl.pallas_call(
        functools.partial(_stats_kernel, eps=eps, inv_n=1.0 / S,
                          s_total=S, s_tile=s_tile),
        out_shape=(stats_shape, stats_shape),
        grid_spec=pltpu.PrefetchScalarGridSpec(
            num_scalar_prefetch=0,
            grid=grid,
            in_specs=[x_spec],
            out_specs=(stat_spec, stat_spec),
        ),
        compiler_params=pltpu.CompilerParams(
            dimension_semantics=("parallel", "parallel", "arbitrary"),
            vmem_limit_bytes=vlim,
        ),
    )(x3)

    return pl.pallas_call(
        _apply_kernel,
        out_shape=jax.ShapeDtypeStruct((B, S, C2), x3.dtype),
        grid_spec=pltpu.PrefetchScalarGridSpec(
            num_scalar_prefetch=0,
            grid=grid,
            in_specs=[x_spec, stat_spec, stat_spec],
            out_specs=x_spec,
        ),
        compiler_params=pltpu.CompilerParams(
            dimension_semantics=("parallel", "parallel", "parallel"),
            vmem_limit_bytes=vlim,
        ),
    )(x3, mean, rstd)


def instance_norm_2d(x, *, eps=1e-5, _force_block_budget=None):
    """x: (batch, time, channel1, channel2). Returns normalized tensor, same shape/dtype."""
    B, T, C1, C2 = x.shape
    S = T * C1
    x3 = x.reshape(B, S, C2)           # contiguous -> free reshape, no wrapper transpose

    vmem_cap = _vmem_capacity_bytes()
    budget = _force_block_budget or _block_budget_bytes(vmem_cap)

    tiles = _choose_resident_tiles(B, S, C2, budget)
    if tiles is not None:
        bt, c2_tile = tiles
        out = _resident_call(x3, bt, c2_tile, eps, vmem_cap)
    else:
        out = _two_pass_call(x3, eps, budget, vmem_cap)
    return out.reshape(B, T, C1, C2)


# ---------------------------------------------------------------------------
# Reference + tests
# ---------------------------------------------------------------------------
def _reference(x, eps=1e-5):
    # Pure-JAX reference mirroring the PyTorch wrapper exactly.
    xt = jnp.swapaxes(x, -1, 1)                        # (B, C2, C1, T)
    mean = jnp.mean(xt, axis=(2, 3), keepdims=True)
    var = jnp.mean((xt - mean) ** 2, axis=(2, 3), keepdims=True)
    yt = (xt - mean) / jnp.sqrt(var + eps)
    return jnp.swapaxes(yt, -1, 1)                     # back to (B, T, C1, C2)


def _check(x, eps=1e-5, atol=1e-4, rtol=1e-4, **kw):
    y = jax.block_until_ready(instance_norm_2d(x, eps=eps, **kw))
    r = _reference(x.astype(jnp.float32), eps=eps)
    assert y.shape == x.shape and y.dtype == x.dtype
    err = jnp.max(jnp.abs(y.astype(jnp.float32) - r))
    assert jnp.allclose(y.astype(jnp.float32), r, atol=atol, rtol=rtol), f"max err {err}"


if __name__ == "__main__":
    key = jax.random.PRNGKey(0)
    k1, k2, k3, k4 = jax.random.split(key, 4)

    # 1) wide lane-aligned channels: resident path, batch folded, >=2 grid steps kept.
    x1 = jax.random.normal(k1, (2, 4, 8, 1024), jnp.float32) * 2.0 + 3.0
    _check(x1)

    # 2) tiny channel2 (SpeechBrain-style (B, 10, 20, 2)): resident path, several
    #    batch instances per block, no wrapper transposes.
    x2 = jax.random.normal(k2, (8, 10, 20, 2), jnp.float32) - 1.5
    _check(x2)

    # 3) bf16 input: f32 accumulation in-kernel, bf16 HBM traffic.
    x3 = jax.random.normal(k3, (2, 8, 16, 128), jnp.float32).astype(jnp.bfloat16)
    _check(x3, atol=3e-2, rtol=3e-2)

    # 4) long-S fallback (forced via a small block budget so it triggers at test size):
    #    S-tiled two-pass structure; ragged last S tile exercises the row mask.
    x4 = jax.random.normal(k4, (2, 72, 16, 256), jnp.float32)
    _check(x4, _force_block_budget=256 * 1024)

    print("KERNEL_OK")
</pallas_src>

<mosaic_0001>
module attributes {stable_mosaic.version = 11 : i64} {
  func.func @_resident_kernel(%arg0: i32, %arg1: i32, %arg2: memref<1x32x1024xf32, #tpu.memory_space<vmem>>, %arg3: memref<1x32x1024xf32, #tpu.memory_space<vmem>>) attributes {dimension_semantics = [#tpu.dimension_semantics<parallel>, #tpu.dimension_semantics<parallel>], iteration_bounds = array<i64: 2, 1>, scalar_prefetch = 0 : i64, scratch_operands = 0 : i64, tpu.core_type = #tpu.core_type<tc>, window_params = [{transform_indices = @transform_0, window_bounds = array<i64: 1, 32, 1024>}, {transform_indices = @transform_1, window_bounds = array<i64: 1, 32, 1024>}]} {
    %c0 = arith.constant 0 : index
    %c0_0 = arith.constant 0 : index
    %c0_1 = arith.constant 0 : index
    %0 = vector.load %arg2[%c0, %c0_0, %c0_1] : memref<1x32x1024xf32, #tpu.memory_space<vmem>>, vector<1x32x1024xf32>
    %cst = arith.constant dense<0.000000e+00> : vector<1x1024xf32>
    %1 = vector.multi_reduction <add>, %0, %cst [1] : vector<1x32x1024xf32> to vector<1x1024xf32>
    %2 = vector.shape_cast %1 : vector<1x1024xf32> to vector<1x1x1024xf32>
    %cst_2 = arith.constant 3.125000e-02 : f32
    %3 = vector.broadcast %cst_2 : f32 to vector<1x1x1024xf32>
    %4 = arith.mulf %2, %3 : vector<1x1x1024xf32>
    %5 = vector.broadcast %4 : vector<1x1x1024xf32> to vector<1x32x1024xf32>
    %6 = arith.subf %0, %5 : vector<1x32x1024xf32>
    %7 = arith.mulf %6, %6 : vector<1x32x1024xf32>
    %cst_3 = arith.constant dense<0.000000e+00> : vector<1x1024xf32>
    %8 = vector.multi_reduction <add>, %7, %cst_3 [1] : vector<1x32x1024xf32> to vector<1x1024xf32>
    %9 = vector.shape_cast %8 : vector<1x1024xf32> to vector<1x1x1024xf32>
    %cst_4 = arith.constant 3.125000e-02 : f32
    %10 = vector.broadcast %cst_4 : f32 to vector<1x1x1024xf32>
    %11 = arith.mulf %9, %10 : vector<1x1x1024xf32>
    %cst_5 = arith.constant 9.99999974E-6 : f32
    %12 = vector.broadcast %cst_5 : f32 to vector<1x1x1024xf32>
    %13 = arith.addf %11, %12 : vector<1x1x1024xf32>
    %14 = math.rsqrt %13 : vector<1x1x1024xf32>
    %15 = vector.broadcast %14 : vector<1x1x1024xf32> to vector<1x32x1024xf32>
    %16 = arith.mulf %6, %15 : vector<1x32x1024xf32>
    %c0_6 = arith.constant 0 : index
    %c0_7 = arith.constant 0 : index
    %c0_8 = arith.constant 0 : index
    %17 = vector.load %arg3[%c0_6, %c0_7, %c0_8] : memref<1x32x1024xf32, #tpu.memory_space<vmem>>, vector<1x32x1024xf32>
    tpu.vector_store %arg3[%c0_6, %c0_7, %c0_8], %16 {strides = array<i32>} : memref<1x32x1024xf32, #tpu.memory_space<vmem>>, vector<1x32x1024xf32>,
    return
  }
  func.func @transform_0(%arg0: i32, %arg1: i32) -> (i32, i32, i32) {
    %c0_i32 = arith.constant 0 : i32
    %c0_i32_0 = arith.constant 0 : i32
    return %arg0, %c0_i32, %arg1 : i32, i32, i32
  }
  func.func @transform_1(%arg0: i32, %arg1: i32) -> (i32, i32, i32) {
    %c0_i32 = arith.constant 0 : i32
    %c0_i32_0 = arith.constant 0 : i32
    return %arg0, %c0_i32, %arg1 : i32, i32, i32
  }
}

</mosaic_0001>

<llo_original>
// kernel: tpu_custom_call.1
$region0: #{tpu_custom_call.1}
  #allocation0 [shape = 'u32[]', space=smem, size = 0x4, offset = 0x4, fixed_abs, tag = 'smem constant byte address 0x4 - core index']
  #allocation1 [shape = 'u32[72,128]{1,0:T(1,128)}', space=vmem, size = 0x9000, scoped, tag = 'internal scratch']
  %s0 = inlined_call_operand.hbm [shape: f32[2,32,1024], index: 0, kind: input, shape index: {}]
  %s1 = inlined_call_operand.hbm [shape: f32[2,32,1024], index: 1, kind: output, shape index: {}]
  %s2 = sld [smem:[#allocation0]]
  $region41: #{tpu_custom_call.1} parent=0
    _
  %s4 = ssub.s32 1, %s2
  %s5 = scalar_select 0, %s4, %s2
  $region1: #{tpu_custom_call.1} parent=0
    #allocation2 [shape = 'u8[262144]{0}', space=vmem, size = 0x40000, scoped, tag = 'input window, operand 0']
    #allocation3 [shape = 's32[2]{0}', space=sflag, size = 0x8, scoped, tag = 'scoped memory for tpu_custom_call.1']
    #allocation4 [shape = 's32[2]{0}', space=sflag, size = 0x8, scoped, tag = 'scoped memory for tpu_custom_call.1']
    #allocation5 [shape = 'u8[262144]{0}', space=vmem, size = 0x40000, scoped, tag = 'output window, operand 0']
    %6 = vsyncpa [#allocation3], 0
    %s7 = scalar_lea.sflag [#allocation3], 1
    %8 = vsyncpa %s7, 0
    %9 = vsyncpa [#allocation4], 0
    %s10 = scalar_lea.sflag [#allocation4], 1
    %11 = vsyncpa %s10, 0
    loop: start=0, step=1, limit=4
    $region2: #{tpu_custom_call.1} parent=1 // loop_pre_header
      _
    $region3: #{tpu_custom_call.1} parent=1 // loop_header
      %s13 = sphi 0, %s17
      %p14 = scmp.ge.s32.totalorder %s13, 4
      %s20 = sphi 0, %s32
      %s21 = sphi 0, %s28
      %s22 = sphi 0, %s20
      %s23 = sphi 0, %s21
      %s24 = sphi 0, %s22
      %s25 = sphi 0, %s23
      %s37 = sphi 0, %s39
      %s40 = sphi 0, %s37
      %s41 = sphi 0, %s40
      %s57 = sphi 0, %s41
      %s65 = sphi 0, %s67
      %s68 = sphi 0, %s65
      %s69 = sphi 0, %s68
      %s85 = sphi 0, %s69
    $region4: #{tpu_custom_call.1} parent=1 // loop_header_branch
      %16 = sbr.rel (%p14) target = $region8
    $region5: #{tpu_custom_call.1} parent=1 // loop_body
      %s18 = ssub.s32 %s13, 1
      %s19 = ssub.s32 %s13, 2
      %s26 = sadd.s32 1, %s21
      %p27 = scmp.ge.s32.totalorder %s26, 1
      %s28 = scalar_select %p27, 0, %s26
      %s29 = sadd.s32 1, %s20
      %s30 = scalar_select %p27, %s29, %s20
      %p31 = scmp.ge.s32.totalorder %s30, 2
      %s32 = scalar_select %p31, 0, %s30
      %s33 = ssub.s32 %s20, %s32
      %s34 = ssub.s32 %s21, %s28
      %s35 = sor.u32 %s33, %s34
      %p36 = scmp.eq.s32.totalorder %s35, 0
      %s38 = sadd.s32 %s37, 1
      %s39 = scalar_select %p36, %s37, %s38
      %p42 = pneg %p36
      %p43 = scmp.eq.s32.totalorder %s13, 1
      %p44 = por %p42, %p43
      %p45 = scmp.ne.s32.totalorder %s37, %s40
      %p46 = scmp.eq.s32.totalorder %s13, 0
      %p47 = por %p45, %p46
      %p48 = scmp.ne.s32.totalorder %s37, %s40
      %p49 = scmp.eq.s32.totalorder %s18, 1
      %p50 = por %p48, %p49
      %p51 = scmp.ne.s32.totalorder %s40, %s41
      %p52 = scmp.eq.s32.totalorder %s18, 0
      %p53 = por %p51, %p52
      %p54 = scmp.ne.s32.totalorder %s40, %s41
      %p55 = scmp.eq.s32.totalorder %s19, 1
      %p56 = por %p54, %p55
      %p58 = scmp.ne.s32.totalorder %s41, %s57
      %p59 = scmp.eq.s32.totalorder %s19, 0
      %p60 = por %p58, %p59
      %s61 = ssub.s32 %s20, %s32
      %s62 = ssub.s32 %s21, %s28
      %s63 = sor.u32 %s61, %s62
      %p64 = scmp.eq.s32.totalorder %s63, 0
      %s66 = sadd.s32 %s65, 1
      %s67 = scalar_select %p64, %s65, %s66
      %p70 = pneg %p64
      %p71 = scmp.eq.s32.totalorder %s13, 1
      %p72 = por %p70, %p71
      %p73 = scmp.ne.s32.totalorder %s65, %s68
      %p74 = scmp.eq.s32.totalorder %s13, 0
      %p75 = por %p73, %p74
      %p76 = scmp.ne.s32.totalorder %s65, %s68
      %p77 = scmp.eq.s32.totalorder %s18, 1
      %p78 = por %p76, %p77
      %p79 = scmp.ne.s32.totalorder %s68, %s69
      %p80 = scmp.eq.s32.totalorder %s18, 0
      %p81 = por %p79, %p80
      %p82 = scmp.ne.s32.totalorder %s68, %s69
      %p83 = scmp.eq.s32.totalorder %s19, 1
      %p84 = por %p82, %p83
      %p86 = scmp.ne.s32.totalorder %s69, %s85
      %p87 = scmp.eq.s32.totalorder %s19, 0
      %p88 = por %p86, %p87
      %p89 = scmp.le.s32.totalorder 1, %s13
      %p90 = scmp.lt.s32.totalorder %s13, 3
      %p91 = pnand %p89, %p90
      %p92 = pneg %p91
      // Predicated region
      $region9: #{tpu_custom_call.1} parent=5 // pred_check
        _
      $region10: #{tpu_custom_call.1} parent=5 // pred_check_branch
        %94 = sbr.rel (%p91) target = $region12
      $region11: #{tpu_custom_call.1} parent=5 // pred_region
        %s95 = ssub.s32 %s13, 1
      $region12: #{tpu_custom_call.1} parent=5 // pred_fallthru
        _
      %p96 = scmp.lt.s32.totalorder %s13, 2
      // Predicated region
      $region13: #{tpu_custom_call.1} parent=5 // pred_check
        %p97 = pneg %p96
      $region14: #{tpu_custom_call.1} parent=5 // pred_check_branch
        %99 = sbr.rel (%p97) target = $region16
      $region15: #{tpu_custom_call.1} parent=5 // pred_region
        // Predicated region
        $region17: #{tpu_custom_call.1} parent=15 // pred_check
          %p100 = pneg %p47
        $region18: #{tpu_custom_call.1} parent=15 // pred_check_branch
          %102 = sbr.rel (%p100) target = $region20
        $region19: #{tpu_custom_call.1} parent=15 // pred_region
          %s103 = sand.u32 %s37, 1
          %s104 = scalar_lea.sflag [#allocation3], %s103
          %s105 = sand.u32 %s37, 1
          %s106 = smul.addr %s105, 256
          %s107 = scalar_lea.vmem [#allocation2], %s106
          %s108 = smul.u32 8, %s21
          %110 = vsyncadd %s104, 0
          %s111 = smul.addr %s20, 32
          %s112 = sadd.s32 %s108, %s111
          %s113 = smul.addr %s112, 8
          %s114 = scalar_lea.hbm %s0, %s113
          %s115 = sshll.u32 %s114, 4
          %s116 = int_to_ptr.hbm [resolvable:$true] %s115
          %s117 = sshll.u32 %s107, 4
          %s118 = int_to_ptr.vmem [resolvable:$true] %s117
          %123 = dma.hbm_to_vmem [thread:$0]  %s116, 4096, %s118, %s104, 1024, 1024, 64
        $region20: #{tpu_custom_call.1} parent=15 // pred_fallthru
          _
      $region16: #{tpu_custom_call.1} parent=5 // pred_fallthru
        _
      %p124 = scmp.le.s32.totalorder 1, %s13
      %p125 = scmp.lt.s32.totalorder %s13, 3
      %p126 = pnand %p124, %p125
      %p127 = pneg %p126
      // Predicated region
      $region21: #{tpu_custom_call.1} parent=5 // pred_check
        _
      $region22: #{tpu_custom_call.1} parent=5 // pred_check_branch
        %129 = sbr.rel (%p126) target = $region24
      $region23: #{tpu_custom_call.1} parent=5 // pred_region
        %s130 = ssub.s32 %s13, 1
        %s131 = sand.u32 %s40, 1
        %s132 = scalar_lea.sflag [#allocation3], %s131
        %s133 = sand.u32 %s40, 1
        %s134 = smul.addr %s133, 256
        %s135 = scalar_lea.vmem [#allocation2], %s134
        // Predicated region
        $region25: #{tpu_custom_call.1} parent=23 // pred_check
          %p136 = pneg %p53
        $region26: #{tpu_custom_call.1} parent=23 // pred_check_branch
          %138 = sbr.rel (%p136) target = $region28
        $region27: #{tpu_custom_call.1} parent=23 // pred_region
          %140 = dma.done %s132, 4096
        $region28: #{tpu_custom_call.1} parent=23 // pred_fallthru
          _
        %s141 = sand.u32 %s40, 1
        %s142 = scalar_lea.sflag [#allocation3], %s141
        %s143 = sand.u32 %s40, 1
        %s144 = smul.addr %s143, 256
        %s145 = scalar_lea.vmem [#allocation2], %s144
        %p146 = pneg %p53
        %p147 = pneg %p50
        %p148 = pneg %p81
        %p149 = pneg %p78
        %s150 = sand.u32 %s68, 1
        %s151 = scalar_lea.sflag [#allocation4], %s150
        %s152 = sand.u32 %s68, 1
        %s153 = smul.addr %s152, 256
        %s154 = scalar_lea.vmem [#allocation5], %s153
        %s155 = smul.u32 8, %s23
        %s156 = smul.u32 8, %s23
        %v157 = vld [vmem:[%s135] sm:$0xff]
        %v158 = vld [vmem:[%s135 + $0x8] sm:$0xff]
        %v159 = vld [vmem:[%s135 + $0x10] sm:$0xff]
        %v160 = vld [vmem:[%s135 + $0x18] sm:$0xff]
        %v161 = vld [vmem:[%s135 + $0x20] sm:$0xff]
        %v162 = vld [vmem:[%s135 + $0x28] sm:$0xff]
        %v163 = vld [vmem:[%s135 + $0x30] sm:$0xff]
        %v164 = vld [vmem:[%s135 + $0x38] sm:$0xff]
        %v165 = vld [vmem:[%s135 + $0x40] sm:$0xff]
        %v166 = vld [vmem:[%s135 + $0x48] sm:$0xff]
        %v167 = vld [vmem:[%s135 + $0x50] sm:$0xff]
        %v168 = vld [vmem:[%s135 + $0x58] sm:$0xff]
        %v169 = vld [vmem:[%s135 + $0x60] sm:$0xff]
        %v170 = vld [vmem:[%s135 + $0x68] sm:$0xff]
        %v171 = vld [vmem:[%s135 + $0x70] sm:$0xff]
        %v172 = vld [vmem:[%s135 + $0x78] sm:$0xff]
        %v173 = vld [vmem:[%s135 + $0x80] sm:$0xff]
        %v174 = vld [vmem:[%s135 + $0x88] sm:$0xff]
        %v175 = vld [vmem:[%s135 + $0x90] sm:$0xff]
        %v176 = vld [vmem:[%s135 + $0x98] sm:$0xff]
        %v177 = vld [vmem:[%s135 + $0xa0] sm:$0xff]
        %v178 = vld [vmem:[%s135 + $0xa8] sm:$0xff]
        %v179 = vld [vmem:[%s135 + $0xb0] sm:$0xff]
        %v180 = vld [vmem:[%s135 + $0xb8] sm:$0xff]
        %v181 = vld [vmem:[%s135 + $0xc0] sm:$0xff]
        %v182 = vld [vmem:[%s135 + $0xc8] sm:$0xff]
        %v183 = vld [vmem:[%s135 + $0xd0] sm:$0xff]
        %v184 = vld [vmem:[%s135 + $0xd8] sm:$0xff]
        %v185 = vld [vmem:[%s135 + $0xe0] sm:$0xff]
        %v186 = vld [vmem:[%s135 + $0xe8] sm:$0xff]
        %v187 = vld [vmem:[%s135 + $0xf0] sm:$0xff]
        %v188 = vld [vmem:[%s135 + $0xf8] sm:$0xff]
        %v189 = vadd.f32 %v157, %v165
        %v190 = vadd.f32 %v189, %v173
        %v191 = vadd.f32 %v190, %v181
        %v192 = vrot.slane %v191, 4
        %v193 = vadd.f32 %v191, %v192
        %v194 = vrot.slane %v193, 2
        %v195 = vadd.f32 %v193, %v194
        %v196 = vrot.slane %v195, 1
        %v197 = vadd.f32 %v195, %v196
        %v198 = vadd.f32 %v158, %v166
        %v199 = vadd.f32 %v198, %v174
        %v200 = vadd.f32 %v199, %v182
        %v201 = vrot.slane %v200, 4
        %v202 = vadd.f32 %v200, %v201
        %v203 = vrot.slane %v202, 2
        %v204 = vadd.f32 %v202, %v203
        %v205 = vrot.slane %v204, 1
        %v206 = vadd.f32 %v204, %v205
        %v207 = vadd.f32 %v159, %v167
        %v208 = vadd.f32 %v207, %v175
        %v209 = vadd.f32 %v208, %v183
        %v210 = vrot.slane %v209, 4
        %v211 = vadd.f32 %v209, %v210
        %v212 = vrot.slane %v211, 2
        %v213 = vadd.f32 %v211, %v212
        %v214 = vrot.slane %v213, 1
        %v215 = vadd.f32 %v213, %v214
        %v216 = vadd.f32 %v160, %v168
        %v217 = vadd.f32 %v216, %v176
        %v218 = vadd.f32 %v217, %v184
        %v219 = vrot.slane %v218, 4
        %v220 = vadd.f32 %v218, %v219
        %v221 = vrot.slane %v220, 2
        %v222 = vadd.f32 %v220, %v221
        %v223 = vrot.slane %v222, 1
        %v224 = vadd.f32 %v222, %v223
        %v225 = vadd.f32 %v161, %v169
        %v226 = vadd.f32 %v225, %v177
        %v227 = vadd.f32 %v226, %v185
        %v228 = vrot.slane %v227, 4
        %v229 = vadd.f32 %v227, %v228
        %v230 = vrot.slane %v229, 2
        %v231 = vadd.f32 %v229, %v230
        %v232 = vrot.slane %v231, 1
        %v233 = vadd.f32 %v231, %v232
        %v234 = vadd.f32 %v162, %v170
        %v235 = vadd.f32 %v234, %v178
        %v236 = vadd.f32 %v235, %v186
        %v237 = vrot.slane %v236, 4
        %v238 = vadd.f32 %v236, %v237
        %v239 = vrot.slane %v238, 2
        %v240 = vadd.f32 %v238, %v239
        %v241 = vrot.slane %v240, 1
        %v242 = vadd.f32 %v240, %v241
        %v243 = vadd.f32 %v163, %v171
        %v244 = vadd.f32 %v243, %v179
        %v245 = vadd.f32 %v244, %v187
        %v246 = vrot.slane %v245, 4
        %v247 = vadd.f32 %v245, %v246
        %v248 = vrot.slane %v247, 2
        %v249 = vadd.f32 %v247, %v248
        %v250 = vrot.slane %v249, 1
        %v251 = vadd.f32 %v249, %v250
        %v252 = vadd.f32 %v164, %v172
        %v253 = vadd.f32 %v252, %v180
        %v254 = vadd.f32 %v253, %v188
        %v255 = vrot.slane %v254, 4
        %v256 = vadd.f32 %v254, %v255
        %v257 = vrot.slane %v256, 2
        %v258 = vadd.f32 %v256, %v257
        %v259 = vrot.slane %v258, 1
        %v260 = vadd.f32 %v258, %v259
        %v261 = vmul.f32 %v197, 0.03125
        %v262 = vmul.f32 %v206, 0.03125
        %v263 = vmul.f32 %v215, 0.03125
        %v264 = vmul.f32 %v224, 0.03125
        %v265 = vmul.f32 %v233, 0.03125
        %v266 = vmul.f32 %v242, 0.03125
        %v267 = vmul.f32 %v251, 0.03125
        %v268 = vmul.f32 %v260, 0.03125
        %v269 = vsub.f32 %v157, %v261
        %v270 = vsub.f32 %v158, %v262
        %v271 = vsub.f32 %v159, %v263
        %v272 = vsub.f32 %v160, %v264
        %v273 = vsub.f32 %v161, %v265
        %v274 = vsub.f32 %v162, %v266
        %v275 = vsub.f32 %v163, %v267
        %v276 = vsub.f32 %v164, %v268
        %v277 = vsub.f32 %v165, %v261
        %v278 = vsub.f32 %v166, %v262
        %v279 = vsub.f32 %v167, %v263
        %v280 = vsub.f32 %v168, %v264
        %v281 = vsub.f32 %v169, %v265
        %v282 = vsub.f32 %v170, %v266
        %v283 = vsub.f32 %v171, %v267
        %v284 = vsub.f32 %v172, %v268
        %v285 = vsub.f32 %v173, %v261
        %v286 = vsub.f32 %v174, %v262
        %v287 = vsub.f32 %v175, %v263
        %v288 = vsub.f32 %v176, %v264
        %v289 = vsub.f32 %v177, %v265
        %v290 = vsub.f32 %v178, %v266
        %v291 = vsub.f32 %v179, %v267
        %v292 = vsub.f32 %v180, %v268
        %v293 = vsub.f32 %v181, %v261
        %v294 = vsub.f32 %v182, %v262
        %v295 = vsub.f32 %v183, %v263
        %v296 = vsub.f32 %v184, %v264
        %v297 = vsub.f32 %v185, %v265
        %v298 = vsub.f32 %v186, %v266
        %v299 = vsub.f32 %v187, %v267
        %v300 = vsub.f32 %v188, %v268
        %v301 = vmul.f32 %v269, %v269
        %v302 = vmul.f32 %v270, %v270
        %v303 = vmul.f32 %v271, %v271
        %v304 = vmul.f32 %v272, %v272
        %v305 = vmul.f32 %v273, %v273
        %v306 = vmul.f32 %v274, %v274
        %v307 = vmul.f32 %v275, %v275
        %v308 = vmul.f32 %v276, %v276
        %v309 = vmul.f32 %v277, %v277
        %v310 = vmul.f32 %v278, %v278
        %v311 = vmul.f32 %v279, %v279
        %v312 = vmul.f32 %v280, %v280
        %v313 = vmul.f32 %v281, %v281
        %v314 = vmul.f32 %v282, %v282
        %v315 = vmul.f32 %v283, %v283
        %v316 = vmul.f32 %v284, %v284
        %v317 = vmul.f32 %v285, %v285
        %v318 = vmul.f32 %v286, %v286
        %v319 = vmul.f32 %v287, %v287
        %v320 = vmul.f32 %v288, %v288
        %v321 = vmul.f32 %v289, %v289
        %v322 = vmul.f32 %v290, %v290
        %v323 = vmul.f32 %v291, %v291
        %v324 = vmul.f32 %v292, %v292
        %v325 = vmul.f32 %v293, %v293
        %v326 = vmul.f32 %v294, %v294
        %v327 = vmul.f32 %v295, %v295
        %v328 = vmul.f32 %v296, %v296
        %v329 = vmul.f32 %v297, %v297
        %v330 = vmul.f32 %v298, %v298
        %v331 = vmul.f32 %v299, %v299
        %v332 = vmul.f32 %v300, %v300
        %v333 = vadd.f32 %v301, %v309
        %v334 = vadd.f32 %v333, %v317
        %v335 = vadd.f32 %v334, %v325
        %v336 = vrot.slane %v335, 4
        %v337 = vadd.f32 %v335, %v336
        %v338 = vrot.slane %v337, 2
        %v339 = vadd.f32 %v337, %v338
        %v340 = vrot.slane %v339, 1
        %v341 = vadd.f32 %v339, %v340
        %v342 = vadd.f32 %v302, %v310
        %v343 = vadd.f32 %v342, %v318
        %v344 = vadd.f32 %v343, %v326
        %v345 = vrot.slane %v344, 4
        %v346 = vadd.f32 %v344, %v345
        %v347 = vrot.slane %v346, 2
        %v348 = vadd.f32 %v346, %v347
        %v349 = vrot.slane %v348, 1
        %v350 = vadd.f32 %v348, %v349
        %v351 = vadd.f32 %v303, %v311
        %v352 = vadd.f32 %v351, %v319
        %v353 = vadd.f32 %v352, %v327
        %v354 = vrot.slane %v353, 4
        %v355 = vadd.f32 %v353, %v354
        %v356 = vrot.slane %v355, 2
        %v357 = vadd.f32 %v355, %v356
        %v358 = vrot.slane %v357, 1
        %v359 = vadd.f32 %v357, %v358
        %v360 = vadd.f32 %v304, %v312
        %v361 = vadd.f32 %v360, %v320
        %v362 = vadd.f32 %v361, %v328
        %v363 = vrot.slane %v362, 4
        %v364 = vadd.f32 %v362, %v363
        %v365 = vrot.slane %v364, 2
        %v366 = vadd.f32 %v364, %v365
        %v367 = vrot.slane %v366, 1
        %v368 = vadd.f32 %v366, %v367
        %v369 = vadd.f32 %v305, %v313
        %v370 = vadd.f32 %v369, %v321
        %v371 = vadd.f32 %v370, %v329
        %v372 = vrot.slane %v371, 4
        %v373 = vadd.f32 %v371, %v372
        %v374 = vrot.slane %v373, 2
        %v375 = vadd.f32 %v373, %v374
        %v376 = vrot.slane %v375, 1
        %v377 = vadd.f32 %v375, %v376
        %v378 = vadd.f32 %v306, %v314
        %v379 = vadd.f32 %v378, %v322
        %v380 = vadd.f32 %v379, %v330
        %v381 = vrot.slane %v380, 4
        %v382 = vadd.f32 %v380, %v381
        %v383 = vrot.slane %v382, 2
        %v384 = vadd.f32 %v382, %v383
        %v385 = vrot.slane %v384, 1
        %v386 = vadd.f32 %v384, %v385
        %v387 = vadd.f32 %v307, %v315
        %v388 = vadd.f32 %v387, %v323
        %v389 = vadd.f32 %v388, %v331
        %v390 = vrot.slane %v389, 4
        %v391 = vadd.f32 %v389, %v390
        %v392 = vrot.slane %v391, 2
        %v393 = vadd.f32 %v391, %v392
        %v394 = vrot.slane %v393, 1
        %v395 = vadd.f32 %v393, %v394
        %v396 = vadd.f32 %v308, %v316
        %v397 = vadd.f32 %v396, %v324
        %v398 = vadd.f32 %v397, %v332
        %v399 = vrot.slane %v398, 4
        %v400 = vadd.f32 %v398, %v399
        %v401 = vrot.slane %v400, 2
        %v402 = vadd.f32 %v400, %v401
        %v403 = vrot.slane %v402, 1
        %v404 = vadd.f32 %v402, %v403
        %v405 = vmul.f32 %v341, 0.03125
        %v406 = vmul.f32 %v350, 0.03125
        %v407 = vmul.f32 %v359, 0.03125
        %v408 = vmul.f32 %v368, 0.03125
        %v409 = vmul.f32 %v377, 0.03125
        %v410 = vmul.f32 %v386, 0.03125
        %v411 = vmul.f32 %v395, 0.03125
        %v412 = vmul.f32 %v404, 0.03125
        %v413 = vadd.f32 %v405, 1e-05
        %v414 = vadd.f32 %v406, 1e-05
        %v415 = vadd.f32 %v407, 1e-05
        %v416 = vadd.f32 %v408, 1e-05
        %v417 = vadd.f32 %v409, 1e-05
        %v418 = vadd.f32 %v410, 1e-05
        %v419 = vadd.f32 %v411, 1e-05
        %v420 = vadd.f32 %v412, 1e-05
        %v421 = vrsqrt.pop %v413
        %v422 = vmul.f32 %v421, %v413
        %v423 = vmul.f32 %v422, %v421
        %v424 = vmul.f32 0.5, %v423
        %v425 = vsub.f32 1.5, %v424
        %v426 = vmul.f32 %v421, %v425
        %vm427 = vweird.f32 %v413
        %vm428 = vweird.f32 %v421
        %vm429 = vmor %vm427, %vm428
        %v430 = vsel %vm429, %v421, %v426
        %v431 = vrsqrt.pop %v414
        %v432 = vmul.f32 %v431, %v414
        %v433 = vmul.f32 %v432, %v431
        %v434 = vmul.f32 0.5, %v433
        %v435 = vsub.f32 1.5, %v434
        %v436 = vmul.f32 %v431, %v435
        %vm437 = vweird.f32 %v414
        %vm438 = vweird.f32 %v431
        %vm439 = vmor %vm437, %vm438
        %v440 = vsel %vm439, %v431, %v436
        %v441 = vrsqrt.pop %v415
        %v442 = vmul.f32 %v441, %v415
        %v443 = vmul.f32 %v442, %v441
        %v444 = vmul.f32 0.5, %v443
        %v445 = vsub.f32 1.5, %v444
        %v446 = vmul.f32 %v441, %v445
        %vm447 = vweird.f32 %v415
        %vm448 = vweird.f32 %v441
        %vm449 = vmor %vm447, %vm448
        %v450 = vsel %vm449, %v441, %v446
        %v451 = vrsqrt.pop %v416
        %v452 = vmul.f32 %v451, %v416
        %v453 = vmul.f32 %v452, %v451
        %v454 = vmul.f32 0.5, %v453
        %v455 = vsub.f32 1.5, %v454
        %v456 = vmul.f32 %v451, %v455
        %vm457 = vweird.f32 %v416
        %vm458 = vweird.f32 %v451
        %vm459 = vmor %vm457, %vm458
        %v460 = vsel %vm459, %v451, %v456
        %v461 = vrsqrt.pop %v417
        %v462 = vmul.f32 %v461, %v417
        %v463 = vmul.f32 %v462, %v461
        %v464 = vmul.f32 0.5, %v463
        %v465 = vsub.f32 1.5, %v464
        %v466 = vmul.f32 %v461, %v465
        %vm467 = vweird.f32 %v417
        %vm468 = vweird.f32 %v461
        %vm469 = vmor %vm467, %vm468
        %v470 = vsel %vm469, %v461, %v466
        %v471 = vrsqrt.pop %v418
        %v472 = vmul.f32 %v471, %v418
        %v473 = vmul.f32 %v472, %v471
        %v474 = vmul.f32 0.5, %v473
        %v475 = vsub.f32 1.5, %v474
        %v476 = vmul.f32 %v471, %v475
        %vm477 = vweird.f32 %v418
        %vm478 = vweird.f32 %v471
        %vm479 = vmor %vm477, %vm478
        %v480 = vsel %vm479, %v471, %v476
        %v481 = vrsqrt.pop %v419
        %v482 = vmul.f32 %v481, %v419
        %v483 = vmul.f32 %v482, %v481
        %v484 = vmul.f32 0.5, %v483
        %v485 = vsub.f32 1.5, %v484
        %v486 = vmul.f32 %v481, %v485
        %vm487 = vweird.f32 %v419
        %vm488 = vweird.f32 %v481
        %vm489 = vmor %vm487, %vm488
        %v490 = vsel %vm489, %v481, %v486
        %v491 = vrsqrt.pop %v420
        %v492 = vmul.f32 %v491, %v420
        %v493 = vmul.f32 %v492, %v491
        %v494 = vmul.f32 0.5, %v493
        %v495 = vsub.f32 1.5, %v494
        %v496 = vmul.f32 %v491, %v495
        %vm497 = vweird.f32 %v420
        %vm498 = vweird.f32 %v491
        %vm499 = vmor %vm497, %vm498
        %v500 = vsel %vm499, %v491, %v496
        %v501 = vmul.f32 %v269, %v430
        %v502 = vmul.f32 %v270, %v440
        %v503 = vmul.f32 %v271, %v450
        %v504 = vmul.f32 %v272, %v460
        %v505 = vmul.f32 %v273, %v470
        %v506 = vmul.f32 %v274, %v480
        %v507 = vmul.f32 %v275, %v490
        %v508 = vmul.f32 %v276, %v500
        %v509 = vmul.f32 %v277, %v430
        %v510 = vmul.f32 %v278, %v440
        %v511 = vmul.f32 %v279, %v450
        %v512 = vmul.f32 %v280, %v460
        %v513 = vmul.f32 %v281, %v470
        %v514 = vmul.f32 %v282, %v480
        %v515 = vmul.f32 %v283, %v490
        %v516 = vmul.f32 %v284, %v500
        %v517 = vmul.f32 %v285, %v430
        %v518 = vmul.f32 %v286, %v440
        %v519 = vmul.f32 %v287, %v450
        %v520 = vmul.f32 %v288, %v460
        %v521 = vmul.f32 %v289, %v470
        %v522 = vmul.f32 %v290, %v480
        %v523 = vmul.f32 %v291, %v490
        %v524 = vmul.f32 %v292, %v500
        %v525 = vmul.f32 %v293, %v430
        %v526 = vmul.f32 %v294, %v440
        %v527 = vmul.f32 %v295, %v450
        %v528 = vmul.f32 %v296, %v460
        %v529 = vmul.f32 %v297, %v470
        %v530 = vmul.f32 %v298, %v480
        %v531 = vmul.f32 %v299, %v490
        %v532 = vmul.f32 %v300, %v500
        %533 = vst [vmem:[%s154] sm:$0xff] %v501
        %534 = vst [vmem:[%s154 + $0x8] sm:$0xff] %v502
        %535 = vst [vmem:[%s154 + $0x10] sm:$0xff] %v503
        %536 = vst [vmem:[%s154 + $0x18] sm:$0xff] %v504
        %537 = vst [vmem:[%s154 + $0x20] sm:$0xff] %v505
        %538 = vst [vmem:[%s154 + $0x28] sm:$0xff] %v506
        %539 = vst [vmem:[%s154 + $0x30] sm:$0xff] %v507
        %540 = vst [vmem:[%s154 + $0x38] sm:$0xff] %v508
        %541 = vst [vmem:[%s154 + $0x40] sm:$0xff] %v509
        %542 = vst [vmem:[%s154 + $0x48] sm:$0xff] %v510
        %543 = vst [vmem:[%s154 + $0x50] sm:$0xff] %v511
        %544 = vst [vmem:[%s154 + $0x58] sm:$0xff] %v512
        %545 = vst [vmem:[%s154 + $0x60] sm:$0xff] %v513
        %546 = vst [vmem:[%s154 + $0x68] sm:$0xff] %v514
        %547 = vst [vmem:[%s154 + $0x70] sm:$0xff] %v515
        %548 = vst [vmem:[%s154 + $0x78] sm:$0xff] %v516
        %549 = vst [vmem:[%s154 + $0x80] sm:$0xff] %v517
        %550 = vst [vmem:[%s154 + $0x88] sm:$0xff] %v518
        %551 = vst [vmem:[%s154 + $0x90] sm:$0xff] %v519
        %552 = vst [vmem:[%s154 + $0x98] sm:$0xff] %v520
        %553 = vst [vmem:[%s154 + $0xa0] sm:$0xff] %v521
        %554 = vst [vmem:[%s154 + $0xa8] sm:$0xff] %v522
        %555 = vst [vmem:[%s154 + $0xb0] sm:$0xff] %v523
        %556 = vst [vmem:[%s154 + $0xb8] sm:$0xff] %v524
        %557 = vst [vmem:[%s154 + $0xc0] sm:$0xff] %v525
        %558 = vst [vmem:[%s154 + $0xc8] sm:$0xff] %v526
        %559 = vst [vmem:[%s154 + $0xd0] sm:$0xff] %v527
        %560 = vst [vmem:[%s154 + $0xd8] sm:$0xff] %v528
        %561 = vst [vmem:[%s154 + $0xe0] sm:$0xff] %v529
        %562 = vst [vmem:[%s154 + $0xe8] sm:$0xff] %v530
        %563 = vst [vmem:[%s154 + $0xf0] sm:$0xff] %v531
        %564 = vst [vmem:[%s154 + $0xf8] sm:$0xff] %v532
        %s565 = sand.u32 %s68, 1
        %s566 = scalar_lea.sflag [#allocation4], %s565
        %s567 = sand.u32 %s68, 1
        %s568 = smul.addr %s567, 256
        %s569 = scalar_lea.vmem [#allocation5], %s568
        // Predicated region
        $region29: #{tpu_custom_call.1} parent=23 // pred_check
          %p570 = pneg %p78
        $region30: #{tpu_custom_call.1} parent=23 // pred_check_branch
          %572 = sbr.rel (%p570) target = $region32
        $region31: #{tpu_custom_call.1} parent=23 // pred_region
          %s573 = smul.u32 8, %s23
          %575 = vsyncadd %s566, 0
          %s576 = smul.addr %s22, 32
          %s577 = sadd.s32 %s573, %s576
          %s578 = smul.addr %s577, 8
          %s579 = scalar_lea.hbm %s1, %s578
          %s580 = sshll.u32 %s569, 4
          %s581 = int_to_ptr.vmem [resolvable:$true] %s580
          %s582 = sshll.u32 %s579, 4
          %s583 = int_to_ptr.hbm [resolvable:$true] %s582
          %588 = dma.vmem_to_hbm [thread:$0]  %s581, 4096, %s583, %s566, 1024, 1024, 64
        $region32: #{tpu_custom_call.1} parent=23 // pred_fallthru
          _
      $region24: #{tpu_custom_call.1} parent=5 // pred_fallthru
        _
      %p589 = scmp.le.s32.totalorder 2, %s13
      // Predicated region
      $region33: #{tpu_custom_call.1} parent=5 // pred_check
        %p590 = pneg %p589
      $region34: #{tpu_custom_call.1} parent=5 // pred_check_branch
        %592 = sbr.rel (%p590) target = $region36
      $region35: #{tpu_custom_call.1} parent=5 // pred_region
        %s593 = ssub.s32 %s13, 2
        // Predicated region
        $region37: #{tpu_custom_call.1} parent=35 // pred_check
          %p594 = pneg %p84
        $region38: #{tpu_custom_call.1} parent=35 // pred_check_branch
          %596 = sbr.rel (%p594) target = $region40
        $region39: #{tpu_custom_call.1} parent=35 // pred_region
          %s597 = sand.u32 %s69, 1
          %s598 = scalar_lea.sflag [#allocation4], %s597
          %s599 = sand.u32 %s69, 1
          %s600 = smul.addr %s599, 256
          %s601 = scalar_lea.vmem [#allocation5], %s600
          %603 = dma.done %s598, 4096
        $region40: #{tpu_custom_call.1} parent=35 // pred_fallthru
          _
      $region36: #{tpu_custom_call.1} parent=5 // pred_fallthru
        _
    $region6: #{tpu_custom_call.1} parent=1 // loop_footer
      %s17 = sadd.s32 1, %s13
    $region7: #{tpu_custom_call.1} parent=1 // loop_footer_branch
      %12 = sbr.rel target = $region3
    $region8: #{tpu_custom_call.1} parent=1 // loop_exit
      _
    %604 = vsyncpa [#allocation3], 1
    %s605 = scalar_lea.sflag [#allocation3], 1
    %606 = vsyncpa %s605, 1
    %607 = vsyncpa [#allocation4], 1
    %s608 = scalar_lea.sflag [#allocation4], 1
    %609 = vsyncpa %s608, 1

</llo_original>
